<compile_context>
chip_gen: v7x
topology: tpu7x:2x2x1
jax: 0.10.0
libtpu: 0.0.40
codegen_flags: <defaults>
</compile_context>

<pallas_src>
import math
import functools

import jax
import jax.numpy as jnp
from jax import lax
from jax.experimental import pallas as pl
from jax.experimental.pallas import tpu as pltpu


# Set to jnp.bfloat16 on v5e/v6e/v7x for the fast MXU path (accumulation, LN
# statistics and softmax m/l stats stay f32). Kept f32 so the demo matches the
# f32 reference.
COMPUTE_DTYPE = jnp.float32


@functools.lru_cache(maxsize=1)
def _vmem_limit():
    """Scoped-VMEM budget: v7x has 64 MiB physical, v5e/v6e have 128 MiB."""
    try:
        kind = jax.devices()[0].device_kind.lower()
    except Exception:
        kind = ""
    if "v7" in kind:
        return 48 * 1024 * 1024
    return 64 * 1024 * 1024


def _tile(dim, target, align):
    """Largest tile <= target dividing `dim`, preferring (8,128)-aligned sizes."""
    if dim <= target:
        return dim
    t = (target // align) * align
    while t >= align:
        if dim % t == 0:
            return t
        t -= align
    # Fallback: any divisor (may be misaligned -> masked stores); last resort full dim.
    for t in range(target, 0, -1):
        if dim % t == 0:
            return t
    return dim


# ----------------------------------------------------------------------------
# Kernel 1: fused LayerNorm1 + QKV projection + head split
# ----------------------------------------------------------------------------
def _make_ln_qkv_kernel(H, dk, eps):
    D = H * dk

    def kernel(x_ref, g_ref, bln_ref, w_ref, b_ref, q_ref, k_ref, v_ref):
        x = x_ref[0].astype(jnp.float32)                       # (tl, D)
        # PyTorch LayerNorm semantics: unbiased std, eps added to std.
        mean = jnp.mean(x, axis=-1, keepdims=True)
        xc = x - mean
        std = jnp.sqrt(jnp.sum(xc * xc, axis=-1, keepdims=True) / (D - 1))
        inv = 1.0 / (std + eps)                                # (tl, 1) -> cheap
        nx = g_ref[...] * (xc * inv) + bln_ref[...]

        y = jnp.dot(nx.astype(COMPUTE_DTYPE), w_ref[...].astype(COMPUTE_DTYPE),
                    preferred_element_type=jnp.float32) + b_ref[...]   # (tl, 3D)
        y = y.astype(q_ref.dtype)

        # Head split in VMEM (static lane slices) + strided stores via out_specs.
        for h in range(H):
            q_ref[0, h] = y[:, h * dk:(h + 1) * dk]
            k_ref[0, h] = y[:, D + h * dk:D + (h + 1) * dk]
            v_ref[0, h] = y[:, 2 * D + h * dk:2 * D + (h + 1) * dk]

    return kernel


def ln_qkv_heads(x, gamma, beta, w_qkv, b_qkv, H, *, eps=1e-6, tl_target=256):
    """x: (B,L,D); w_qkv: (D,3D) (scale folded into the Q slice) -> 3x (B,H,L,dk)."""
    B, L, D = x.shape
    dk = D // H
    tl = _tile(L, tl_target, 8)
    out_sh = jax.ShapeDtypeStruct((B, H, L, dk), x.dtype)
    head_spec = pl.BlockSpec((1, H, tl, dk), lambda b, i: (b, 0, i, 0))
    return pl.pallas_call(
        _make_ln_qkv_kernel(H, dk, eps),
        out_shape=(out_sh, out_sh, out_sh),
        grid_spec=pltpu.PrefetchScalarGridSpec(
            num_scalar_prefetch=0,
            grid=(B, L // tl),
            in_specs=[
                pl.BlockSpec((1, tl, D), lambda b, i: (b, i, 0)),
                pl.BlockSpec((1, D), lambda b, i: (0, 0)),
                pl.BlockSpec((1, D), lambda b, i: (0, 0)),
                pl.BlockSpec((D, 3 * D), lambda b, i: (0, 0)),   # weight stays resident
                pl.BlockSpec((1, 3 * D), lambda b, i: (0, 0)),
            ],
            out_specs=(head_spec, head_spec, head_spec),
        ),
        compiler_params=pltpu.CompilerParams(
            dimension_semantics=("parallel", "parallel"),
            vmem_limit_bytes=_vmem_limit()),
    )(x, gamma.reshape(1, D), beta.reshape(1, D), w_qkv, b_qkv.reshape(1, 3 * D))


# ----------------------------------------------------------------------------
# Kernel 2: flash attention (online softmax, KV-tiled reduction axis)
# ----------------------------------------------------------------------------
def _flash_attn_kernel(q_ref, k_ref, v_ref, o_ref, m_sc, l_sc, acc_sc):
    ki = pl.program_id(3)

    @pl.when(ki == 0)
    def _():
        m_sc[...] = jnp.full_like(m_sc, -jnp.inf)
        l_sc[...] = jnp.zeros_like(l_sc)
        acc_sc[...] = jnp.zeros_like(acc_sc)

    q = q_ref[0, 0].astype(COMPUTE_DTYPE)                      # (tq, dk), scale folded in
    k = k_ref[0, 0].astype(COMPUTE_DTYPE)                      # (tk, dk)
    v = v_ref[0, 0].astype(COMPUTE_DTYPE)                      # (tk, dk)

    # Contract the last axes of q and k directly -> no k.T / XLU transpose per step.
    s = lax.dot_general(q, k, (((1,), (1,)), ((), ())),
                        preferred_element_type=jnp.float32)     # (tq, tk)

    m_prev = m_sc[...]
    m_new = jnp.maximum(m_prev, jnp.max(s, axis=-1, keepdims=True))
    alpha = jnp.exp(m_prev - m_new)
    p = jnp.exp(s - m_new)
    l_sc[...] = alpha * l_sc[...] + jnp.sum(p, axis=-1, keepdims=True)
    acc_sc[...] = alpha * acc_sc[...] + jnp.dot(
        p.astype(COMPUTE_DTYPE), v, preferred_element_type=jnp.float32)
    m_sc[...] = m_new

    @pl.when(ki == pl.num_programs(3) - 1)
    def _():
        # Exact reciprocal on a (tq,1) vector (once per q tile): essentially free.
        o_ref[0, 0] = (acc_sc[...] * (1.0 / l_sc[...])).astype(o_ref.dtype)


def flash_attention(q, k, v, *, tq_target=256, tk_target=1024):
    """q,k,v: (B,H,L,dk) -> (B,H,L,dk). Softmax scale already folded into q."""
    B, H, Lq, dk = q.shape
    Lk = k.shape[2]
    tq = _tile(Lq, tq_target, 8)
    tk = _tile(Lk, tk_target, 8)
    return pl.pallas_call(
        _flash_attn_kernel,
        out_shape=jax.ShapeDtypeStruct((B, H, Lq, dk), q.dtype),
        grid_spec=pltpu.PrefetchScalarGridSpec(
            num_scalar_prefetch=0,
            grid=(B, H, Lq // tq, Lk // tk),
            in_specs=[
                pl.BlockSpec((1, 1, tq, dk), lambda b, h, qi, ki: (b, h, qi, 0)),
                pl.BlockSpec((1, 1, tk, dk), lambda b, h, qi, ki: (b, h, ki, 0)),
                pl.BlockSpec((1, 1, tk, dk), lambda b, h, qi, ki: (b, h, ki, 0)),
            ],
            out_specs=pl.BlockSpec((1, 1, tq, dk),
                                   lambda b, h, qi, ki: (b, h, qi, 0)),
            scratch_shapes=[
                pltpu.VMEM((tq, 1), jnp.float32),    # running max m
                pltpu.VMEM((tq, 1), jnp.float32),    # running sum l
                pltpu.VMEM((tq, dk), jnp.float32),   # running accumulator
            ],
        ),
        compiler_params=pltpu.CompilerParams(
            dimension_semantics=("parallel", "parallel", "parallel", "arbitrary"),
            vmem_limit_bytes=_vmem_limit()),
    )(q, k, v)


# ----------------------------------------------------------------------------
# Kernel 3: head merge + W_o + bias + residual (no head-merge transpose)
# ----------------------------------------------------------------------------
def _make_attn_out_kernel(H):
    def kernel(a_ref, w_ref, b_ref, r_ref, o_ref):
        acc = jnp.dot(a_ref[0, 0].astype(COMPUTE_DTYPE),
                      w_ref[0].astype(COMPUTE_DTYPE),
                      preferred_element_type=jnp.float32)
        for h in range(1, H):
            acc = acc + jnp.dot(a_ref[0, h].astype(COMPUTE_DTYPE),
                                w_ref[h].astype(COMPUTE_DTYPE),
                                preferred_element_type=jnp.float32)
        y = acc + b_ref[...].astype(jnp.float32) + r_ref[0].astype(jnp.float32)
        o_ref[0] = y.astype(o_ref.dtype)
    return kernel


def attn_out_residual(attn, w_o_heads, b_o, residual, *, tl_target=256):
    """attn: (B,H,L,dk); w_o_heads: (H,dk,D); residual: (B,L,D) -> (B,L,D)."""
    B, H, L, dk = attn.shape
    D = w_o_heads.shape[-1]
    tl = _tile(L, tl_target, 8)
    return pl.pallas_call(
        _make_attn_out_kernel(H),
        out_shape=jax.ShapeDtypeStruct((B, L, D), residual.dtype),
        grid_spec=pltpu.PrefetchScalarGridSpec(
            num_scalar_prefetch=0,
            grid=(B, L // tl),
            in_specs=[
                pl.BlockSpec((1, H, tl, dk), lambda b, i: (b, 0, i, 0)),
                pl.BlockSpec((H, dk, D), lambda b, i: (0, 0, 0)),
                pl.BlockSpec((1, D), lambda b, i: (0, 0)),
                pl.BlockSpec((1, tl, D), lambda b, i: (b, i, 0)),
            ],
            out_specs=pl.BlockSpec((1, tl, D), lambda b, i: (b, i, 0)),
        ),
        compiler_params=pltpu.CompilerParams(
            dimension_semantics=("parallel", "parallel"),
            vmem_limit_bytes=_vmem_limit()),
    )(attn, w_o_heads, b_o.reshape(1, D), residual)


# ----------------------------------------------------------------------------
# Kernel 4: generic tiled linear  y = act(LN?(x) @ W + b) [+ residual]
# ----------------------------------------------------------------------------
def _make_linear_kernel(activation, fuse_ln, has_res, eps):
    def kernel(*refs):
        it = iter(refs)
        x_ref = next(it)
        if fuse_ln:
            g_ref = next(it)
            bln_ref = next(it)
        w_ref = next(it)
        b_ref = next(it)
        r_ref = next(it) if has_res else None
        o_ref = next(it)

        x = x_ref[0].astype(jnp.float32)                       # (tl, D_in)
        if fuse_ln:
            d = x.shape[-1]
            mean = jnp.mean(x, axis=-1, keepdims=True)
            xc = x - mean
            std = jnp.sqrt(jnp.sum(xc * xc, axis=-1, keepdims=True) / (d - 1))
            x = g_ref[...] * (xc * (1.0 / (std + eps))) + bln_ref[...]

        y = jnp.dot(x.astype(COMPUTE_DTYPE), w_ref[...].astype(COMPUTE_DTYPE),
                    preferred_element_type=jnp.float32) + b_ref[...].astype(jnp.float32)
        if activation == "relu":
            y = jnp.maximum(y, 0.0)
        if has_res:
            y = y + r_ref[0].astype(jnp.float32)
        o_ref[0] = y.astype(o_ref.dtype)
    return kernel


def linear(x, w_t, b, *, gamma=None, beta=None, residual=None, activation=None,
           eps=1e-6, tl_target=256, tn_target=512):
    """x: (B,L,D_in), w_t: (D_in,D_out) pre-transposed, b: (D_out,)."""
    B, L, D_in = x.shape
    D_out = w_t.shape[1]
    tl = _tile(L, tl_target, 8)
    tn = _tile(D_out, tn_target, 128)
    nr, nc = L // tl, D_out // tn
    fuse_ln = gamma is not None
    has_res = residual is not None

    # Pick the grid order from HBM byte counts so the bigger operand is resident.
    x_bytes = B * L * D_in * x.dtype.itemsize
    w_bytes = D_in * D_out * w_t.dtype.itemsize
    t_cols_inner = x_bytes + (w_bytes if nc == 1 else B * nr * w_bytes)
    t_rows_inner = ((x_bytes if nr == 1 else nc * x_bytes)
                    + (w_bytes if nc == 1 else B * w_bytes))
    cols_inner = t_cols_inner <= t_rows_inner

    if cols_inner:                      # grid = (B, rows, cols): x tile resident
        grid = (B, nr, nc)
        xmap = lambda bb, i, j: (bb, i, 0)
        wmap = lambda bb, i, j: (0, j)
        gmap = lambda bb, i, j: (0, 0)
        omap = lambda bb, i, j: (bb, i, j)
    else:                               # grid = (B, cols, rows): weight tile resident
        grid = (B, nc, nr)
        xmap = lambda bb, j, i: (bb, i, 0)
        wmap = lambda bb, j, i: (0, j)
        gmap = lambda bb, j, i: (0, 0)
        omap = lambda bb, j, i: (bb, i, j)

    in_specs = [pl.BlockSpec((1, tl, D_in), xmap)]
    args = [x]
    if fuse_ln:
        in_specs += [pl.BlockSpec((1, D_in), gmap), pl.BlockSpec((1, D_in), gmap)]
        args += [gamma.reshape(1, D_in), beta.reshape(1, D_in)]
    in_specs += [pl.BlockSpec((D_in, tn), wmap), pl.BlockSpec((1, tn), wmap)]
    args += [w_t, b.reshape(1, D_out)]
    if has_res:
        in_specs += [pl.BlockSpec((1, tl, tn), omap)]
        args += [residual]

    return pl.pallas_call(
        _make_linear_kernel(activation, fuse_ln, has_res, eps),
        out_shape=jax.ShapeDtypeStruct((B, L, D_out), x.dtype),
        grid_spec=pltpu.PrefetchScalarGridSpec(
            num_scalar_prefetch=0, grid=grid,
            in_specs=in_specs,
            out_specs=pl.BlockSpec((1, tl, tn), omap)),
        compiler_params=pltpu.CompilerParams(
            dimension_semantics=("parallel", "parallel", "parallel"),
            vmem_limit_bytes=_vmem_limit()),
    )(*args)


# ----------------------------------------------------------------------------
# Parameters & module wrapper
# ----------------------------------------------------------------------------
def init_encoder_params(key, d_model, d_ff):
    ks = jax.random.split(key, 12)
    bound_d = 1.0 / math.sqrt(d_model)
    bound_f = 1.0 / math.sqrt(d_ff)

    def lin(kw, kb, d_in, d_out, bound):
        # Stored pre-transposed as (d_in, d_out) so kernels compute x @ W + b.
        w = jax.random.uniform(kw, (d_in, d_out), jnp.float32, -bound, bound)
        b = jax.random.uniform(kb, (d_out,), jnp.float32, -bound, bound)
        return w, b

    wq, bq = lin(ks[0], ks[1], d_model, d_model, bound_d)
    wk, bk = lin(ks[2], ks[3], d_model, d_model, bound_d)
    wv, bv = lin(ks[4], ks[5], d_model, d_model, bound_d)
    wo, bo = lin(ks[6], ks[7], d_model, d_model, bound_d)
    w1, b1 = lin(ks[8], ks[9], d_model, d_ff, bound_d)
    w2, b2 = lin(ks[10], ks[11], d_ff, d_model, bound_f)
    return dict(
        wq=wq, bq=bq, wk=wk, bk=bk, wv=wv, bv=bv, wo=wo, bo=bo,
        w1=w1, b1=b1, w2=w2, b2=b2,
        ln1_g=jnp.ones((d_model,), jnp.float32),
        ln1_b=jnp.zeros((d_model,), jnp.float32),
        ln2_g=jnp.ones((d_model,), jnp.float32),
        ln2_b=jnp.zeros((d_model,), jnp.float32),
    )


def encoder_layer(params, x, h, mask=None):
    """Pallas EncoderLayer.forward (eval mode: dropout == identity, mask=None)."""
    assert mask is None  # TODO(synk): attention mask not implemented.
    B, L, d_model = x.shape
    d_k = d_model // h
    scale = 1.0 / math.sqrt(d_k)

    # Packed QKV weights; softmax scale folded into the Q slice.
    w_qkv = jnp.concatenate(
        [params["wq"] * scale, params["wk"], params["wv"]], axis=1)
    b_qkv = jnp.concatenate(
        [params["bq"] * scale, params["bk"], params["bv"]], axis=0)

    # ---- sublayer 0: x + W_o( SelfAttn( LayerNorm1(x) ) ) ---------------------
    # LN1 + QKV projection + head split fused (no standalone LN, no transposes).
    q, k, v = ln_qkv_heads(x, params["ln1_g"], params["ln1_b"], w_qkv, b_qkv, h)
    attn = flash_attention(q, k, v)                                # (B, H, L, d_k)
    # Head merge + output projection + residual fused.
    x = attn_out_residual(attn, params["wo"].reshape(h, d_k, d_model),
                          params["bo"], x)

    # ---- sublayer 1: x + W_2( relu( W_1( LayerNorm2(x) ) ) ) ------------------
    hdn = linear(x, params["w1"], params["b1"],
                 gamma=params["ln2_g"], beta=params["ln2_b"], activation="relu")
    x = linear(hdn, params["w2"], params["b2"], residual=x)
    return x


# ----------------------------------------------------------------------------
# Pure-JAX reference (matches PyTorch module semantics) for a correctness check.
# ----------------------------------------------------------------------------
def reference_encoder_layer(params, x, h, eps=1e-6):
    B, L, d_model = x.shape
    d_k = d_model // h

    def ln(y, g, b):
        mean = jnp.mean(y, axis=-1, keepdims=True)
        yc = y - mean
        std = jnp.sqrt(jnp.sum(yc * yc, axis=-1, keepdims=True) / (y.shape[-1] - 1))
        return g * yc / (std + eps) + b

    def mha(q_in, k_in, v_in):
        q = q_in @ params["wq"] + params["bq"]
        k = k_in @ params["wk"] + params["bk"]
        v = v_in @ params["wv"] + params["bv"]
        q = q.reshape(B, L, h, d_k).transpose(0, 2, 1, 3)
        k = k.reshape(B, L, h, d_k).transpose(0, 2, 1, 3)
        v = v.reshape(B, L, h, d_k).transpose(0, 2, 1, 3)
        s = jnp.einsum("bhqd,bhkd->bhqk", q, k) / math.sqrt(d_k)
        p = jax.nn.softmax(s, axis=-1)
        o = jnp.einsum("bhqk,bhkd->bhqd", p, v)
        o = o.transpose(0, 2, 1, 3).reshape(B, L, d_model)
        return o @ params["wo"] + params["bo"]

    nx = ln(x, params["ln1_g"], params["ln1_b"])
    x = x + mha(nx, nx, nx)
    nx = ln(x, params["ln2_g"], params["ln2_b"])
    ffn = jnp.maximum(nx @ params["w1"] + params["b1"], 0.0) @ params["w2"] + params["b2"]
    return x + ffn


if __name__ == "__main__":
    B, L, d_model, h, d_ff = 2, 8, 32, 4, 64

    root = jax.random.PRNGKey(0)
    k_params, k_x = jax.random.split(root)
    params = init_encoder_params(k_params, d_model, d_ff)
    x = jax.random.normal(k_x, (B, L, d_model), jnp.float32)

    out = encoder_layer(params, x, h)
    out = jax.block_until_ready(out)

    ref = reference_encoder_layer(params, x, h)
    assert out.shape == (B, L, d_model)
    err = jnp.max(jnp.abs(out - ref))
    assert jnp.allclose(out, ref, atol=1e-3, rtol=1e-3), f"max abs err {err}"

    print("KERNEL_OK")
</pallas_src>

<mosaic_0001>
module attributes {stable_mosaic.version = 11 : i64} {
  func.func @kernel(%arg0: i32, %arg1: i32, %arg2: memref<1x8x32xf32, #tpu.memory_space<vmem>>, %arg3: memref<1x32xf32, #tpu.memory_space<vmem>>, %arg4: memref<1x32xf32, #tpu.memory_space<vmem>>, %arg5: memref<32x96xf32, #tpu.memory_space<vmem>>, %arg6: memref<1x96xf32, #tpu.memory_space<vmem>>, %arg7: memref<1x4x8x8xf32, #tpu.memory_space<vmem>>, %arg8: memref<1x4x8x8xf32, #tpu.memory_space<vmem>>, %arg9: memref<1x4x8x8xf32, #tpu.memory_space<vmem>>) attributes {dimension_semantics = [#tpu.dimension_semantics<parallel>, #tpu.dimension_semantics<parallel>], iteration_bounds = array<i64: 2, 1>, scalar_prefetch = 0 : i64, scratch_operands = 0 : i64, tpu.core_type = #tpu.core_type<tc>, window_params = [{transform_indices = @transform_0, window_bounds = array<i64: 1, 8, 32>}, {pipeline_mode = #tpu.pipeline_mode<synchronous>, transform_indices = @transform_1, window_bounds = array<i64: 1, 32>}, {pipeline_mode = #tpu.pipeline_mode<synchronous>, transform_indices = @transform_2, window_bounds = array<i64: 1, 32>}, {pipeline_mode = #tpu.pipeline_mode<synchronous>, transform_indices = @transform_3, window_bounds = array<i64: 32, 96>}, {pipeline_mode = #tpu.pipeline_mode<synchronous>, transform_indices = @transform_4, window_bounds = array<i64: 1, 96>}, {transform_indices = @transform_5, window_bounds = array<i64: 1, 4, 8, 8>}, {transform_indices = @transform_6, window_bounds = array<i64: 1, 4, 8, 8>}, {transform_indices = @transform_7, window_bounds = array<i64: 1, 4, 8, 8>}]} {
    %c0 = arith.constant 0 : index
    %c0_0 = arith.constant 0 : index
    %c0_1 = arith.constant 0 : index
    %0 = vector.load %arg2[%c0, %c0_0, %c0_1] : memref<1x8x32xf32, #tpu.memory_space<vmem>>, vector<1x8x32xf32>
    %1 = vector.shape_cast %0 : vector<1x8x32xf32> to vector<8x32xf32>
    %cst = arith.constant dense<0.000000e+00> : vector<8xf32>
    %2 = vector.multi_reduction <add>, %1, %cst [1] : vector<8x32xf32> to vector<8xf32>
    %3 = vector.shape_cast %2 : vector<8xf32> to vector<8x1xf32>
    %cst_2 = arith.constant 3.200000e+01 : f32
    %4 = vector.broadcast %cst_2 : f32 to vector<8x1xf32>
    %5 = arith.divf %3, %4 : vector<8x1xf32>
    %6 = vector.broadcast %5 : vector<8x1xf32> to vector<8x32xf32>
    %7 = arith.subf %1, %6 : vector<8x32xf32>
    %8 = arith.mulf %7, %7 : vector<8x32xf32>
    %cst_3 = arith.constant dense<0.000000e+00> : vector<8xf32>
    %9 = vector.multi_reduction <add>, %8, %cst_3 [1] : vector<8x32xf32> to vector<8xf32>
    %10 = vector.shape_cast %9 : vector<8xf32> to vector<8x1xf32>
    %cst_4 = arith.constant 3.100000e+01 : f32
    %11 = vector.broadcast %cst_4 : f32 to vector<8x1xf32>
    %12 = arith.divf %10, %11 : vector<8x1xf32>
    %13 = math.sqrt %12 : vector<8x1xf32>
    %cst_5 = arith.constant 9.99999997E-7 : f32
    %14 = vector.broadcast %cst_5 : f32 to vector<8x1xf32>
    %15 = arith.addf %13, %14 : vector<8x1xf32>
    %cst_6 = arith.constant 1.000000e+00 : f32
    %16 = vector.broadcast %cst_6 : f32 to vector<8x1xf32>
    %17 = arith.divf %16, %15 : vector<8x1xf32>
    %c0_7 = arith.constant 0 : index
    %c0_8 = arith.constant 0 : index
    %18 = vector.load %arg3[%c0_7, %c0_8] : memref<1x32xf32, #tpu.memory_space<vmem>>, vector<1x32xf32>
    %19 = vector.broadcast %17 : vector<8x1xf32> to vector<8x32xf32>
    %20 = arith.mulf %7, %19 : vector<8x32xf32>
    %21 = vector.broadcast %18 : vector<1x32xf32> to vector<8x32xf32>
    %22 = arith.mulf %21, %20 : vector<8x32xf32>
    %c0_9 = arith.constant 0 : index
    %c0_10 = arith.constant 0 : index
    %23 = vector.load %arg4[%c0_9, %c0_10] : memref<1x32xf32, #tpu.memory_space<vmem>>, vector<1x32xf32>
    %24 = vector.broadcast %23 : vector<1x32xf32> to vector<8x32xf32>
    %25 = arith.addf %22, %24 : vector<8x32xf32>
    %c0_11 = arith.constant 0 : index
    %c0_12 = arith.constant 0 : index
    %26 = vector.load %arg5[%c0_11, %c0_12] : memref<32x96xf32, #tpu.memory_space<vmem>>, vector<32x96xf32>
    %cst_13 = arith.constant dense<0.000000e+00> : vector<8x96xf32>
    %27 = tpu.matmul %25, %26, %cst_13 {dimension_numbers = #tpu.dot_dimension_numbers<[1], [0], [0], [1], [0, 0, 1, 1], [], []>} : vector<8x32xf32>, vector<32x96xf32>, vector<8x96xf32> -> vector<8x96xf32>
    %c0_14 = arith.constant 0 : index
    %c0_15 = arith.constant 0 : index
    %28 = vector.load %arg6[%c0_14, %c0_15] : memref<1x96xf32, #tpu.memory_space<vmem>>, vector<1x96xf32>
    %29 = vector.broadcast %28 : vector<1x96xf32> to vector<8x96xf32>
    %30 = arith.addf %27, %29 : vector<8x96xf32>
    %31 = vector.extract_strided_slice %30 {offsets = [0, 0], sizes = [8, 8], strides = [1, 1]} : vector<8x96xf32> to vector<8x8xf32>
    %c0_16 = arith.constant 0 : index
    %c0_17 = arith.constant 0 : index
    %c0_18 = arith.constant 0 : index
    %c0_19 = arith.constant 0 : index
    %32 = vector.load %arg7[%c0_16, %c0_17, %c0_18, %c0_19] : memref<1x4x8x8xf32, #tpu.memory_space<vmem>>, vector<1x1x8x8xf32>
    %33 = vector.shape_cast %32 : vector<1x1x8x8xf32> to vector<8x8xf32>
    %34 = vector.shape_cast %31 : vector<8x8xf32> to vector<1x1x8x8xf32>
    tpu.vector_store %arg7[%c0_16, %c0_17, %c0_18, %c0_19], %34 {strides = array<i32>} : memref<1x4x8x8xf32, #tpu.memory_space<vmem>>, vector<1x1x8x8xf32>,
    %35 = vector.extract_strided_slice %30 {offsets = [0, 32], sizes = [8, 8], strides = [1, 1]} : vector<8x96xf32> to vector<8x8xf32>
    %c0_20 = arith.constant 0 : index
    %c0_21 = arith.constant 0 : index
    %c0_22 = arith.constant 0 : index
    %c0_23 = arith.constant 0 : index
    %36 = vector.load %arg8[%c0_20, %c0_21, %c0_22, %c0_23] : memref<1x4x8x8xf32, #tpu.memory_space<vmem>>, vector<1x1x8x8xf32>
    %37 = vector.shape_cast %36 : vector<1x1x8x8xf32> to vector<8x8xf32>
    %38 = vector.shape_cast %35 : vector<8x8xf32> to vector<1x1x8x8xf32>
    tpu.vector_store %arg8[%c0_20, %c0_21, %c0_22, %c0_23], %38 {strides = array<i32>} : memref<1x4x8x8xf32, #tpu.memory_space<vmem>>, vector<1x1x8x8xf32>,
    %39 = vector.extract_strided_slice %30 {offsets = [0, 64], sizes = [8, 8], strides = [1, 1]} : vector<8x96xf32> to vector<8x8xf32>
    %c0_24 = arith.constant 0 : index
    %c0_25 = arith.constant 0 : index
    %c0_26 = arith.constant 0 : index
    %c0_27 = arith.constant 0 : index
    %40 = vector.load %arg9[%c0_24, %c0_25, %c0_26, %c0_27] : memref<1x4x8x8xf32, #tpu.memory_space<vmem>>, vector<1x1x8x8xf32>
    %41 = vector.shape_cast %40 : vector<1x1x8x8xf32> to vector<8x8xf32>
    %42 = vector.shape_cast %39 : vector<8x8xf32> to vector<1x1x8x8xf32>
    tpu.vector_store %arg9[%c0_24, %c0_25, %c0_26, %c0_27], %42 {strides = array<i32>} : memref<1x4x8x8xf32, #tpu.memory_space<vmem>>, vector<1x1x8x8xf32>,
    %43 = vector.extract_strided_slice %30 {offsets = [0, 8], sizes = [8, 8], strides = [1, 1]} : vector<8x96xf32> to vector<8x8xf32>
    %c0_28 = arith.constant 0 : index
    %c1 = arith.constant 1 : index
    %c0_29 = arith.constant 0 : index
    %c0_30 = arith.constant 0 : index
    %44 = vector.load %arg7[%c0_28, %c1, %c0_29, %c0_30] : memref<1x4x8x8xf32, #tpu.memory_space<vmem>>, vector<1x1x8x8xf32>
    %45 = vector.shape_cast %44 : vector<1x1x8x8xf32> to vector<8x8xf32>
    %46 = vector.shape_cast %43 : vector<8x8xf32> to vector<1x1x8x8xf32>
    tpu.vector_store %arg7[%c0_28, %c1, %c0_29, %c0_30], %46 {strides = array<i32>} : memref<1x4x8x8xf32, #tpu.memory_space<vmem>>, vector<1x1x8x8xf32>,
    %47 = vector.extract_strided_slice %30 {offsets = [0, 40], sizes = [8, 8], strides = [1, 1]} : vector<8x96xf32> to vector<8x8xf32>
    %c0_31 = arith.constant 0 : index
    %c1_32 = arith.constant 1 : index
    %c0_33 = arith.constant 0 : index
    %c0_34 = arith.constant 0 : index
    %48 = vector.load %arg8[%c0_31, %c1_32, %c0_33, %c0_34] : memref<1x4x8x8xf32, #tpu.memory_space<vmem>>, vector<1x1x8x8xf32>
    %49 = vector.shape_cast %48 : vector<1x1x8x8xf32> to vector<8x8xf32>
    %50 = vector.shape_cast %47 : vector<8x8xf32> to vector<1x1x8x8xf32>
    tpu.vector_store %arg8[%c0_31, %c1_32, %c0_33, %c0_34], %50 {strides = array<i32>} : memref<1x4x8x8xf32, #tpu.memory_space<vmem>>, vector<1x1x8x8xf32>,
    %51 = vector.extract_strided_slice %30 {offsets = [0, 72], sizes = [8, 8], strides = [1, 1]} : vector<8x96xf32> to vector<8x8xf32>
    %c0_35 = arith.constant 0 : index
    %c1_36 = arith.constant 1 : index
    %c0_37 = arith.constant 0 : index
    %c0_38 = arith.constant 0 : index
    %52 = vector.load %arg9[%c0_35, %c1_36, %c0_37, %c0_38] : memref<1x4x8x8xf32, #tpu.memory_space<vmem>>, vector<1x1x8x8xf32>
    %53 = vector.shape_cast %52 : vector<1x1x8x8xf32> to vector<8x8xf32>
    %54 = vector.shape_cast %51 : vector<8x8xf32> to vector<1x1x8x8xf32>
    tpu.vector_store %arg9[%c0_35, %c1_36, %c0_37, %c0_38], %54 {strides = array<i32>} : memref<1x4x8x8xf32, #tpu.memory_space<vmem>>, vector<1x1x8x8xf32>,
    %55 = vector.extract_strided_slice %30 {offsets = [0, 16], sizes = [8, 8], strides = [1, 1]} : vector<8x96xf32> to vector<8x8xf32>
    %c0_39 = arith.constant 0 : index
    %c2 = arith.constant 2 : index
    %c0_40 = arith.constant 0 : index
    %c0_41 = arith.constant 0 : index
    %56 = vector.load %arg7[%c0_39, %c2, %c0_40, %c0_41] : memref<1x4x8x8xf32, #tpu.memory_space<vmem>>, vector<1x1x8x8xf32>
    %57 = vector.shape_cast %56 : vector<1x1x8x8xf32> to vector<8x8xf32>
    %58 = vector.shape_cast %55 : vector<8x8xf32> to vector<1x1x8x8xf32>
    tpu.vector_store %arg7[%c0_39, %c2, %c0_40, %c0_41], %58 {strides = array<i32>} : memref<1x4x8x8xf32, #tpu.memory_space<vmem>>, vector<1x1x8x8xf32>,
    %59 = vector.extract_strided_slice %30 {offsets = [0, 48], sizes = [8, 8], strides = [1, 1]} : vector<8x96xf32> to vector<8x8xf32>
    %c0_42 = arith.constant 0 : index
    %c2_43 = arith.constant 2 : index
    %c0_44 = arith.constant 0 : index
    %c0_45 = arith.constant 0 : index
    %60 = vector.load %arg8[%c0_42, %c2_43, %c0_44, %c0_45] : memref<1x4x8x8xf32, #tpu.memory_space<vmem>>, vector<1x1x8x8xf32>
    %61 = vector.shape_cast %60 : vector<1x1x8x8xf32> to vector<8x8xf32>
    %62 = vector.shape_cast %59 : vector<8x8xf32> to vector<1x1x8x8xf32>
    tpu.vector_store %arg8[%c0_42, %c2_43, %c0_44, %c0_45], %62 {strides = array<i32>} : memref<1x4x8x8xf32, #tpu.memory_space<vmem>>, vector<1x1x8x8xf32>,
    %63 = vector.extract_strided_slice %30 {offsets = [0, 80], sizes = [8, 8], strides = [1, 1]} : vector<8x96xf32> to vector<8x8xf32>
    %c0_46 = arith.constant 0 : index
    %c2_47 = arith.constant 2 : index
    %c0_48 = arith.constant 0 : index
    %c0_49 = arith.constant 0 : index
    %64 = vector.load %arg9[%c0_46, %c2_47, %c0_48, %c0_49] : memref<1x4x8x8xf32, #tpu.memory_space<vmem>>, vector<1x1x8x8xf32>
    %65 = vector.shape_cast %64 : vector<1x1x8x8xf32> to vector<8x8xf32>
    %66 = vector.shape_cast %63 : vector<8x8xf32> to vector<1x1x8x8xf32>
    tpu.vector_store %arg9[%c0_46, %c2_47, %c0_48, %c0_49], %66 {strides = array<i32>} : memref<1x4x8x8xf32, #tpu.memory_space<vmem>>, vector<1x1x8x8xf32>,
    %67 = vector.extract_strided_slice %30 {offsets = [0, 24], sizes = [8, 8], strides = [1, 1]} : vector<8x96xf32> to vector<8x8xf32>
    %c0_50 = arith.constant 0 : index
    %c3 = arith.constant 3 : index
    %c0_51 = arith.constant 0 : index
    %c0_52 = arith.constant 0 : index
    %68 = vector.load %arg7[%c0_50, %c3, %c0_51, %c0_52] : memref<1x4x8x8xf32, #tpu.memory_space<vmem>>, vector<1x1x8x8xf32>
    %69 = vector.shape_cast %68 : vector<1x1x8x8xf32> to vector<8x8xf32>
    %70 = vector.shape_cast %67 : vector<8x8xf32> to vector<1x1x8x8xf32>
    tpu.vector_store %arg7[%c0_50, %c3, %c0_51, %c0_52], %70 {strides = array<i32>} : memref<1x4x8x8xf32, #tpu.memory_space<vmem>>, vector<1x1x8x8xf32>,
    %71 = vector.extract_strided_slice %30 {offsets = [0, 56], sizes = [8, 8], strides = [1, 1]} : vector<8x96xf32> to vector<8x8xf32>
    %c0_53 = arith.constant 0 : index
    %c3_54 = arith.constant 3 : index
    %c0_55 = arith.constant 0 : index
    %c0_56 = arith.constant 0 : index
    %72 = vector.load %arg8[%c0_53, %c3_54, %c0_55, %c0_56] : memref<1x4x8x8xf32, #tpu.memory_space<vmem>>, vector<1x1x8x8xf32>
    %73 = vector.shape_cast %72 : vector<1x1x8x8xf32> to vector<8x8xf32>
    %74 = vector.shape_cast %71 : vector<8x8xf32> to vector<1x1x8x8xf32>
    tpu.vector_store %arg8[%c0_53, %c3_54, %c0_55, %c0_56], %74 {strides = array<i32>} : memref<1x4x8x8xf32, #tpu.memory_space<vmem>>, vector<1x1x8x8xf32>,
    %75 = vector.extract_strided_slice %30 {offsets = [0, 88], sizes = [8, 8], strides = [1, 1]} : vector<8x96xf32> to vector<8x8xf32>
    %c0_57 = arith.constant 0 : index
    %c3_58 = arith.constant 3 : index
    %c0_59 = arith.constant 0 : index
    %c0_60 = arith.constant 0 : index
    %76 = vector.load %arg9[%c0_57, %c3_58, %c0_59, %c0_60] : memref<1x4x8x8xf32, #tpu.memory_space<vmem>>, vector<1x1x8x8xf32>
    %77 = vector.shape_cast %76 : vector<1x1x8x8xf32> to vector<8x8xf32>
    %78 = vector.shape_cast %75 : vector<8x8xf32> to vector<1x1x8x8xf32>
    tpu.vector_store %arg9[%c0_57, %c3_58, %c0_59, %c0_60], %78 {strides = array<i32>} : memref<1x4x8x8xf32, #tpu.memory_space<vmem>>, vector<1x1x8x8xf32>,
    return
  }
  func.func @transform_0(%arg0: i32, %arg1: i32) -> (i32, i32, i32) {
    %c0_i32 = arith.constant 0 : i32
    %c0_i32_0 = arith.constant 0 : i32
    return %arg0, %arg1, %c0_i32 : i32, i32, i32
  }
  func.func @transform_1(%arg0: i32, %arg1: i32) -> (i32, i32) {
    %c0_i32 = arith.constant 0 : i32
    %c0_i32_0 = arith.constant 0 : i32
    %c0_i32_1 = arith.constant 0 : i32
    return %c0_i32, %c0_i32_0 : i32, i32
  }
  func.func @transform_2(%arg0: i32, %arg1: i32) -> (i32, i32) {
    %c0_i32 = arith.constant 0 : i32
    %c0_i32_0 = arith.constant 0 : i32
    %c0_i32_1 = arith.constant 0 : i32
    return %c0_i32, %c0_i32_0 : i32, i32
  }
  func.func @transform_3(%arg0: i32, %arg1: i32) -> (i32, i32) {
    %c0_i32 = arith.constant 0 : i32
    %c0_i32_0 = arith.constant 0 : i32
    %c0_i32_1 = arith.constant 0 : i32
    return %c0_i32, %c0_i32_0 : i32, i32
  }
  func.func @transform_4(%arg0: i32, %arg1: i32) -> (i32, i32) {
    %c0_i32 = arith.constant 0 : i32
    %c0_i32_0 = arith.constant 0 : i32
    %c0_i32_1 = arith.constant 0 : i32
    return %c0_i32, %c0_i32_0 : i32, i32
  }
  func.func @transform_5(%arg0: i32, %arg1: i32) -> (i32, i32, i32, i32) {
    %c0_i32 = arith.constant 0 : i32
    %c0_i32_0 = arith.constant 0 : i32
    %c0_i32_1 = arith.constant 0 : i32
    return %arg0, %c0_i32, %arg1, %c0_i32_0 : i32, i32, i32, i32
  }
  func.func @transform_6(%arg0: i32, %arg1: i32) -> (i32, i32, i32, i32) {
    %c0_i32 = arith.constant 0 : i32
    %c0_i32_0 = arith.constant 0 : i32
    %c0_i32_1 = arith.constant 0 : i32
    return %arg0, %c0_i32, %arg1, %c0_i32_0 : i32, i32, i32, i32
  }
  func.func @transform_7(%arg0: i32, %arg1: i32) -> (i32, i32, i32, i32) {
    %c0_i32 = arith.constant 0 : i32
    %c0_i32_0 = arith.constant 0 : i32
    %c0_i32_1 = arith.constant 0 : i32
    return %arg0, %c0_i32, %arg1, %c0_i32_0 : i32, i32, i32, i32
  }
}

</mosaic_0001>

<llo_original>
// kernel: tpu_custom_call.1
$region0: #{tpu_custom_call.1}
  #allocation0 [shape = 'u32[]', space=smem, size = 0x4, offset = 0x4, fixed_abs, tag = 'smem constant byte address 0x4 - core index']
  #allocation1 [shape = 'u32[144,128]{1,0:T(1,128)}', space=vmem, size = 0x12000, scoped, tag = 'internal scratch']
  %s0 = inlined_call_operand.hbm [shape: f32[2,8,32], index: 0, kind: input, shape index: {}]
  %s1 = inlined_call_operand.hbm [shape: f32[1,32], index: 1, kind: input, shape index: {}]
  %s2 = inlined_call_operand.hbm [shape: f32[1,32], index: 2, kind: input, shape index: {}]
  %s3 = inlined_call_operand.hbm [shape: f32[32,96], index: 3, kind: input, shape index: {}]
  %s4 = inlined_call_operand.hbm [shape: f32[1,96], index: 4, kind: input, shape index: {}]
  %s5 = inlined_call_operand.hbm [shape: f32[2,4,8,8], index: 5, kind: output, shape index: {0}]
  %s6 = inlined_call_operand.hbm [shape: f32[2,4,8,8], index: 6, kind: output, shape index: {1}]
  %s7 = inlined_call_operand.hbm [shape: f32[2,4,8,8], index: 7, kind: output, shape index: {2}]
  %8 = xla_tuple %s5, %s6, %s7
  %s9 = sld [smem:[#allocation0]]
  $region89: #{tpu_custom_call.1} parent=0
    _
  %s11 = ssub.s32 1, %s9
  %s12 = scalar_select 0, %s11, %s9
  $region1: #{tpu_custom_call.1} parent=0
    #allocation2 [shape = 'u8[8192]{0}', space=vmem, size = 0x2000, scoped, tag = 'input window, operand 0']
    #allocation3 [shape = 's32[2]{0}', space=sflag, size = 0x8, scoped, tag = 'scoped memory for tpu_custom_call.1']
    #allocation4 [shape = 's32[2]{0}', space=sflag, size = 0x8, scoped, tag = 'scoped memory for tpu_custom_call.1']
    #allocation5 [shape = 'u8[512]{0}', space=vmem, size = 0x400, scoped, tag = 'input window, operand 1, single buffered']
    #allocation6 [shape = 's32[1]{0}', space=sflag, size = 0x4, scoped, tag = 'scoped memory for tpu_custom_call.1']
    #allocation7 [shape = 'u8[512]{0}', space=vmem, size = 0x400, scoped, tag = 'input window, operand 2, single buffered']
    #allocation8 [shape = 'u8[16384]{0}', space=vmem, size = 0x4000, scoped, tag = 'input window, operand 3, single buffered']
    #allocation9 [shape = 's32[1]{0}', space=sflag, size = 0x4, scoped, tag = 'scoped memory for tpu_custom_call.1']
    #allocation10 [shape = 'u8[512]{0}', space=vmem, size = 0x400, scoped, tag = 'input window, operand 4, single buffered']
    #allocation11 [shape = 'u8[32768]{0}', space=vmem, size = 0x8000, scoped, tag = 'output window, operand 0']
    #allocation12 [shape = 'u8[32768]{0}', space=vmem, size = 0x8000, scoped, tag = 'output window, operand 1']
    #allocation13 [shape = 's32[2]{0}', space=sflag, size = 0x8, scoped, tag = 'scoped memory for tpu_custom_call.1']
    #allocation14 [shape = 'u8[32768]{0}', space=vmem, size = 0x8000, scoped, tag = 'output window, operand 2']
    %13 = vsyncpa [#allocation3], 0
    %s14 = scalar_lea.sflag [#allocation3], 1
    %15 = vsyncpa %s14, 0
    %16 = vsyncpa [#allocation6], 0
    %17 = vsyncpa [#allocation9], 0
    %18 = vsyncpa [#allocation4], 0
    %s19 = scalar_lea.sflag [#allocation4], 1
    %20 = vsyncpa %s19, 0
    %21 = vsyncpa [#allocation13], 0
    %s22 = scalar_lea.sflag [#allocation13], 1
    %23 = vsyncpa %s22, 0
    loop: start=0, step=1, limit=4
    $region2: #{tpu_custom_call.1} parent=1 // loop_pre_header
      _
    $region3: #{tpu_custom_call.1} parent=1 // loop_header
      %s25 = sphi 0, %s29
      %p26 = scmp.ge.s32.totalorder %s25, 4
      %s32 = sphi 0, %s44
      %s33 = sphi 0, %s40
      %s34 = sphi 0, %s32
      %s35 = sphi 0, %s33
      %s36 = sphi 0, %s34
      %s37 = sphi 0, %s35
      %s49 = sphi 0, %s51
      %s52 = sphi 0, %s49
      %s53 = sphi 0, %s52
      %s69 = sphi 0, %s53
      %s73 = sphi 0, %s73
      %s75 = sphi 0, %s73
      %s76 = sphi 0, %s75
      %s90 = sphi 0, %s76
      %s94 = sphi 0, %s94
      %s96 = sphi 0, %s94
      %s97 = sphi 0, %s96
      %s111 = sphi 0, %s97
      %s115 = sphi 0, %s115
      %s117 = sphi 0, %s115
      %s118 = sphi 0, %s117
      %s132 = sphi 0, %s118
      %s136 = sphi 0, %s136
      %s138 = sphi 0, %s136
      %s139 = sphi 0, %s138
      %s153 = sphi 0, %s139
      %s161 = sphi 0, %s163
      %s164 = sphi 0, %s161
      %s165 = sphi 0, %s164
      %s181 = sphi 0, %s165
      %s189 = sphi 0, %s191
      %s192 = sphi 0, %s189
      %s193 = sphi 0, %s192
      %s209 = sphi 0, %s193
      %s217 = sphi 0, %s219
      %s220 = sphi 0, %s217
      %s221 = sphi 0, %s220
      %s237 = sphi 0, %s221
    $region4: #{tpu_custom_call.1} parent=1 // loop_header_branch
      %28 = sbr.rel (%p26) target = $region8
    $region5: #{tpu_custom_call.1} parent=1 // loop_body
      %s30 = ssub.s32 %s25, 1
      %s31 = ssub.s32 %s25, 2
      %s38 = sadd.s32 1, %s33
      %p39 = scmp.ge.s32.totalorder %s38, 1
      %s40 = scalar_select %p39, 0, %s38
      %s41 = sadd.s32 1, %s32
      %s42 = scalar_select %p39, %s41, %s32
      %p43 = scmp.ge.s32.totalorder %s42, 2
      %s44 = scalar_select %p43, 0, %s42
      %s45 = ssub.s32 %s32, %s44
      %s46 = ssub.s32 %s33, %s40
      %s47 = sor.u32 %s45, %s46
      %p48 = scmp.eq.s32.totalorder %s47, 0
      %s50 = sadd.s32 %s49, 1
      %s51 = scalar_select %p48, %s49, %s50
      %p54 = pneg %p48
      %p55 = scmp.eq.s32.totalorder %s25, 1
      %p56 = por %p54, %p55
      %p57 = scmp.ne.s32.totalorder %s49, %s52
      %p58 = scmp.eq.s32.totalorder %s25, 0
      %p59 = por %p57, %p58
      %p60 = scmp.ne.s32.totalorder %s49, %s52
      %p61 = scmp.eq.s32.totalorder %s30, 1
      %p62 = por %p60, %p61
      %p63 = scmp.ne.s32.totalorder %s52, %s53
      %p64 = scmp.eq.s32.totalorder %s30, 0
      %p65 = por %p63, %p64
      %p66 = scmp.ne.s32.totalorder %s52, %s53
      %p67 = scmp.eq.s32.totalorder %s31, 1
      %p68 = por %p66, %p67
      %p70 = scmp.ne.s32.totalorder %s53, %s69
      %p71 = scmp.eq.s32.totalorder %s31, 0
      %p72 = por %p70, %p71
      %s74 = sadd.s32 %s73, 1
      %p77 = scmp.eq.s32.totalorder %s25, 1
      %p78 = scmp.ne.s32.totalorder %s73, %s75
      %p79 = scmp.eq.s32.totalorder %s25, 0
      %p80 = por %p78, %p79
      %p81 = scmp.ne.s32.totalorder %s73, %s75
      %p82 = scmp.eq.s32.totalorder %s30, 1
      %p83 = por %p81, %p82
      %p84 = scmp.ne.s32.totalorder %s75, %s76
      %p85 = scmp.eq.s32.totalorder %s30, 0
      %p86 = por %p84, %p85
      %p87 = scmp.ne.s32.totalorder %s75, %s76
      %p88 = scmp.eq.s32.totalorder %s31, 1
      %p89 = por %p87, %p88
      %p91 = scmp.ne.s32.totalorder %s76, %s90
      %p92 = scmp.eq.s32.totalorder %s31, 0
      %p93 = por %p91, %p92
      %s95 = sadd.s32 %s94, 1
      %p98 = scmp.eq.s32.totalorder %s25, 1
      %p99 = scmp.ne.s32.totalorder %s94, %s96
      %p100 = scmp.eq.s32.totalorder %s25, 0
      %p101 = por %p99, %p100
      %p102 = scmp.ne.s32.totalorder %s94, %s96
      %p103 = scmp.eq.s32.totalorder %s30, 1
      %p104 = por %p102, %p103
      %p105 = scmp.ne.s32.totalorder %s96, %s97
      %p106 = scmp.eq.s32.totalorder %s30, 0
      %p107 = por %p105, %p106
      %p108 = scmp.ne.s32.totalorder %s96, %s97
      %p109 = scmp.eq.s32.totalorder %s31, 1
      %p110 = por %p108, %p109
      %p112 = scmp.ne.s32.totalorder %s97, %s111
      %p113 = scmp.eq.s32.totalorder %s31, 0
      %p114 = por %p112, %p113
      %s116 = sadd.s32 %s115, 1
      %p119 = scmp.eq.s32.totalorder %s25, 1
      %p120 = scmp.ne.s32.totalorder %s115, %s117
      %p121 = scmp.eq.s32.totalorder %s25, 0
      %p122 = por %p120, %p121
      %p123 = scmp.ne.s32.totalorder %s115, %s117
      %p124 = scmp.eq.s32.totalorder %s30, 1
      %p125 = por %p123, %p124
      %p126 = scmp.ne.s32.totalorder %s117, %s118
      %p127 = scmp.eq.s32.totalorder %s30, 0
      %p128 = por %p126, %p127
      %p129 = scmp.ne.s32.totalorder %s117, %s118
      %p130 = scmp.eq.s32.totalorder %s31, 1
      %p131 = por %p129, %p130
      %p133 = scmp.ne.s32.totalorder %s118, %s132
      %p134 = scmp.eq.s32.totalorder %s31, 0
      %p135 = por %p133, %p134
      %s137 = sadd.s32 %s136, 1
      %p140 = scmp.eq.s32.totalorder %s25, 1
      %p141 = scmp.ne.s32.totalorder %s136, %s138
      %p142 = scmp.eq.s32.totalorder %s25, 0
      %p143 = por %p141, %p142
      %p144 = scmp.ne.s32.totalorder %s136, %s138
      %p145 = scmp.eq.s32.totalorder %s30, 1
      %p146 = por %p144, %p145
      %p147 = scmp.ne.s32.totalorder %s138, %s139
      %p148 = scmp.eq.s32.totalorder %s30, 0
      %p149 = por %p147, %p148
      %p150 = scmp.ne.s32.totalorder %s138, %s139
      %p151 = scmp.eq.s32.totalorder %s31, 1
      %p152 = por %p150, %p151
      %p154 = scmp.ne.s32.totalorder %s139, %s153
      %p155 = scmp.eq.s32.totalorder %s31, 0
      %p156 = por %p154, %p155
      %s157 = ssub.s32 %s32, %s44
      %s158 = ssub.s32 %s33, %s40
      %s159 = sor.u32 %s157, %s158
      %p160 = scmp.eq.s32.totalorder %s159, 0
      %s162 = sadd.s32 %s161, 1
      %s163 = scalar_select %p160, %s161, %s162
      %p166 = pneg %p160
      %p167 = scmp.eq.s32.totalorder %s25, 1
      %p168 = por %p166, %p167
      %p169 = scmp.ne.s32.totalorder %s161, %s164
      %p170 = scmp.eq.s32.totalorder %s25, 0
      %p171 = por %p169, %p170
      %p172 = scmp.ne.s32.totalorder %s161, %s164
      %p173 = scmp.eq.s32.totalorder %s30, 1
      %p174 = por %p172, %p173
      %p175 = scmp.ne.s32.totalorder %s164, %s165
      %p176 = scmp.eq.s32.totalorder %s30, 0
      %p177 = por %p175, %p176
      %p178 = scmp.ne.s32.totalorder %s164, %s165
      %p179 = scmp.eq.s32.totalorder %s31, 1
      %p180 = por %p178, %p179
      %p182 = scmp.ne.s32.totalorder %s165, %s181
      %p183 = scmp.eq.s32.totalorder %s31, 0
      %p184 = por %p182, %p183
      %s185 = ssub.s32 %s32, %s44
      %s186 = ssub.s32 %s33, %s40
      %s187 = sor.u32 %s185, %s186
      %p188 = scmp.eq.s32.totalorder %s187, 0
      %s190 = sadd.s32 %s189, 1
      %s191 = scalar_select %p188, %s189, %s190
      %p194 = pneg %p188
      %p195 = scmp.eq.s32.totalorder %s25, 1
      %p196 = por %p194, %p195
      %p197 = scmp.ne.s32.totalorder %s189, %s192
      %p198 = scmp.eq.s32.totalorder %s25, 0
      %p199 = por %p197, %p198
      %p200 = scmp.ne.s32.totalorder %s189, %s192
      %p201 = scmp.eq.s32.totalorder %s30, 1
      %p202 = por %p200, %p201
      %p203 = scmp.ne.s32.totalorder %s192, %s193
      %p204 = scmp.eq.s32.totalorder %s30, 0
      %p205 = por %p203, %p204
      %p206 = scmp.ne.s32.totalorder %s192, %s193
      %p207 = scmp.eq.s32.totalorder %s31, 1
      %p208 = por %p206, %p207
      %p210 = scmp.ne.s32.totalorder %s193, %s209
      %p211 = scmp.eq.s32.totalorder %s31, 0
      %p212 = por %p210, %p211
      %s213 = ssub.s32 %s32, %s44
      %s214 = ssub.s32 %s33, %s40
      %s215 = sor.u32 %s213, %s214
      %p216 = scmp.eq.s32.totalorder %s215, 0
      %s218 = sadd.s32 %s217, 1
      %s219 = scalar_select %p216, %s217, %s218
      %p222 = pneg %p216
      %p223 = scmp.eq.s32.totalorder %s25, 1
      %p224 = por %p222, %p223
      %p225 = scmp.ne.s32.totalorder %s217, %s220
      %p226 = scmp.eq.s32.totalorder %s25, 0
      %p227 = por %p225, %p226
      %p228 = scmp.ne.s32.totalorder %s217, %s220
      %p229 = scmp.eq.s32.totalorder %s30, 1
      %p230 = por %p228, %p229
      %p231 = scmp.ne.s32.totalorder %s220, %s221
      %p232 = scmp.eq.s32.totalorder %s30, 0
      %p233 = por %p231, %p232
      %p234 = scmp.ne.s32.totalorder %s220, %s221
      %p235 = scmp.eq.s32.totalorder %s31, 1
      %p236 = por %p234, %p235
      %p238 = scmp.ne.s32.totalorder %s221, %s237
      %p239 = scmp.eq.s32.totalorder %s31, 0
      %p240 = por %p238, %p239
      %p241 = scmp.le.s32.totalorder 1, %s25
      %p242 = scmp.lt.s32.totalorder %s25, 3
      %p243 = pnand %p241, %p242
      %p244 = pneg %p243
      // Predicated region
      $region9: #{tpu_custom_call.1} parent=5 // pred_check
        _
      $region10: #{tpu_custom_call.1} parent=5 // pred_check_branch
        %246 = sbr.rel (%p243) target = $region12
      $region11: #{tpu_custom_call.1} parent=5 // pred_region
        %s247 = ssub.s32 %s25, 1
        // Predicated region
        $region13: #{tpu_custom_call.1} parent=11 // pred_check
          %p248 = pneg %p86
        $region14: #{tpu_custom_call.1} parent=11 // pred_check_branch
          %250 = sbr.rel (%p248) target = $region16
        $region15: #{tpu_custom_call.1} parent=11 // pred_region
          %s252 = ssub.s32 16, 16
          %253 = vsyncadd [#allocation6], %s252
          %s255 = sshll.u32 [#allocation5], 4
          %s256 = int_to_ptr.vmem [resolvable:$true] %s255
          %258 = dma.hbm_to_vmem [thread:$0]  %s1, 16, %s256, [#allocation6]
        $region16: #{tpu_custom_call.1} parent=11 // pred_fallthru
          _
        // Predicated region
        $region17: #{tpu_custom_call.1} parent=11 // pred_check
          %p259 = pneg %p107
        $region18: #{tpu_custom_call.1} parent=11 // pred_check_branch
          %261 = sbr.rel (%p259) target = $region20
        $region19: #{tpu_custom_call.1} parent=11 // pred_region
          %s263 = ssub.s32 16, 16
          %264 = vsyncadd [#allocation6], %s263
          %s266 = sshll.u32 [#allocation7], 4
          %s267 = int_to_ptr.vmem [resolvable:$true] %s266
          %269 = dma.hbm_to_vmem [thread:$0]  %s2, 16, %s267, [#allocation6]
        $region20: #{tpu_custom_call.1} parent=11 // pred_fallthru
          _
        // Predicated region
        $region21: #{tpu_custom_call.1} parent=11 // pred_check
          %p270 = pneg %p128
        $region22: #{tpu_custom_call.1} parent=11 // pred_check_branch
          %272 = sbr.rel (%p270) target = $region24
        $region23: #{tpu_custom_call.1} parent=11 // pred_region
          %s274 = ssub.s32 512, 512
          %275 = vsyncadd [#allocation9], %s274
          %s276 = sshll.u32 [#allocation8], 4
          %s277 = int_to_ptr.vmem [resolvable:$true] %s276
          %282 = dma.hbm_to_vmem [thread:$0]  %s3, 512, %s277, [#allocation9], 128, 128, 8
        $region24: #{tpu_custom_call.1} parent=11 // pred_fallthru
          _
        // Predicated region
        $region25: #{tpu_custom_call.1} parent=11 // pred_check
          %p283 = pneg %p149
        $region26: #{tpu_custom_call.1} parent=11 // pred_check_branch
          %285 = sbr.rel (%p283) target = $region28
        $region27: #{tpu_custom_call.1} parent=11 // pred_region
          %s287 = ssub.s32 16, 16
          %288 = vsyncadd [#allocation9], %s287
          %s290 = sshll.u32 [#allocation10], 4
          %s291 = int_to_ptr.vmem [resolvable:$true] %s290
          %293 = dma.hbm_to_vmem [thread:$0]  %s4, 16, %s291, [#allocation9]
        $region28: #{tpu_custom_call.1} parent=11 // pred_fallthru
          _
      $region12: #{tpu_custom_call.1} parent=5 // pred_fallthru
        _
      %p294 = scmp.lt.s32.totalorder %s25, 2
      // Predicated region
      $region29: #{tpu_custom_call.1} parent=5 // pred_check
        %p295 = pneg %p294
      $region30: #{tpu_custom_call.1} parent=5 // pred_check_branch
        %297 = sbr.rel (%p295) target = $region32
      $region31: #{tpu_custom_call.1} parent=5 // pred_region
        // Predicated region
        $region33: #{tpu_custom_call.1} parent=31 // pred_check
          %p298 = pneg %p59
        $region34: #{tpu_custom_call.1} parent=31 // pred_check_branch
          %300 = sbr.rel (%p298) target = $region36
        $region35: #{tpu_custom_call.1} parent=31 // pred_region
          %s301 = sand.u32 %s49, 1
          %s302 = scalar_lea.sflag [#allocation3], %s301
          %s303 = sand.u32 %s49, 1
          %s304 = smul.addr %s303, 8
          %s305 = scalar_lea.vmem [#allocation2], %s304
          %s307 = ssub.s32 128, 128
          %308 = vsyncadd %s302, %s307
          %s309 = sadd.s32 %s33, %s32
          %s310 = smul.addr %s309, 128
          %s311 = scalar_lea.hbm %s0, %s310
          %s313 = sshll.u32 %s305, 4
          %s314 = int_to_ptr.vmem [resolvable:$true] %s313
          %316 = dma.hbm_to_vmem [thread:$0]  %s311, 128, %s314, %s302
        $region36: #{tpu_custom_call.1} parent=31 // pred_fallthru
          _
      $region32: #{tpu_custom_call.1} parent=5 // pred_fallthru
        _
      %p317 = scmp.le.s32.totalorder 1, %s25
      %p318 = scmp.lt.s32.totalorder %s25, 3
      %p319 = pnand %p317, %p318
      %p320 = pneg %p319
      // Predicated region
      $region37: #{tpu_custom_call.1} parent=5 // pred_check
        _
      $region38: #{tpu_custom_call.1} parent=5 // pred_check_branch
        %322 = sbr.rel (%p319) target = $region40
      $region39: #{tpu_custom_call.1} parent=5 // pred_region
        %s323 = ssub.s32 %s25, 1
        %s324 = sand.u32 %s52, 1
        %s325 = scalar_lea.sflag [#allocation3], %s324
        %s326 = sand.u32 %s52, 1
        %s327 = smul.addr %s326, 8
        %s328 = scalar_lea.vmem [#allocation2], %s327
        // Predicated region
        $region41: #{tpu_custom_call.1} parent=39 // pred_check
          %p329 = pneg %p65
        $region42: #{tpu_custom_call.1} parent=39 // pred_check_branch
          %331 = sbr.rel (%p329) target = $region44
        $region43: #{tpu_custom_call.1} parent=39 // pred_region
          %332 = dma.done %s325, 128
        $region44: #{tpu_custom_call.1} parent=39 // pred_fallthru
          _
        // Predicated region
        $region45: #{tpu_custom_call.1} parent=39 // pred_check
          %p333 = pneg %p86
        $region46: #{tpu_custom_call.1} parent=39 // pred_check_branch
          %335 = sbr.rel (%p333) target = $region48
        $region47: #{tpu_custom_call.1} parent=39 // pred_region
          %336 = dma.done [#allocation6], 16
        $region48: #{tpu_custom_call.1} parent=39 // pred_fallthru
          _
        // Predicated region
        $region49: #{tpu_custom_call.1} parent=39 // pred_check
          %p337 = pneg %p107
        $region50: #{tpu_custom_call.1} parent=39 // pred_check_branch
          %339 = sbr.rel (%p337) target = $region52
        $region51: #{tpu_custom_call.1} parent=39 // pred_region
          %340 = dma.done [#allocation6], 16
        $region52: #{tpu_custom_call.1} parent=39 // pred_fallthru
          _
        // Predicated region
        $region53: #{tpu_custom_call.1} parent=39 // pred_check
          %p341 = pneg %p128
        $region54: #{tpu_custom_call.1} parent=39 // pred_check_branch
          %343 = sbr.rel (%p341) target = $region56
        $region55: #{tpu_custom_call.1} parent=39 // pred_region
          %344 = dma.done [#allocation9], 512
        $region56: #{tpu_custom_call.1} parent=39 // pred_fallthru
          _
        // Predicated region
        $region57: #{tpu_custom_call.1} parent=39 // pred_check
          %p345 = pneg %p149
        $region58: #{tpu_custom_call.1} parent=39 // pred_check_branch
          %347 = sbr.rel (%p345) target = $region60
        $region59: #{tpu_custom_call.1} parent=39 // pred_region
          %348 = dma.done [#allocation9], 16
        $region60: #{tpu_custom_call.1} parent=39 // pred_fallthru
          _
        %s349 = sand.u32 %s52, 1
        %s350 = scalar_lea.sflag [#allocation3], %s349
        %s351 = sand.u32 %s52, 1
        %s352 = smul.addr %s351, 8
        %s353 = scalar_lea.vmem [#allocation2], %s352
        %p354 = pneg %p65
        %p355 = pneg %p62
        %p356 = pneg %p86
        %p357 = pneg %p83
        %p358 = pneg %p107
        %p359 = pneg %p104
        %p360 = pneg %p128
        %p361 = pneg %p125
        %p362 = pneg %p149
        %p363 = pneg %p146
        %p364 = pneg %p177
        %p365 = pneg %p174
        %s366 = sand.u32 %s164, 1
        %s367 = scalar_lea.sflag [#allocation4], %s366
        %s368 = sand.u32 %s164, 1
        %s369 = smul.addr %s368, 32
        %s370 = scalar_lea.vmem [#allocation11], %s369
        %p371 = pneg %p205
        %p372 = pneg %p202
        %s373 = sand.u32 %s30, 1
        %s374 = scalar_lea.sflag [#allocation13], %s373
        %s375 = sand.u32 %s192, 1
        %s376 = smul.addr %s375, 32
        %s377 = scalar_lea.vmem [#allocation12], %s376
        %p378 = pneg %p233
        %p379 = pneg %p230
        %s380 = sand.u32 %s30, 1
        %s381 = scalar_lea.sflag [#allocation13], %s380
        %s382 = sand.u32 %s220, 1
        %s383 = smul.addr %s382, 32
        %s384 = scalar_lea.vmem [#allocation14], %s383
        %v385 = vld [vmem:[%s328] sm:$0xff]
        %vm386 = vcmask 261120
        %v387 = vsel %vm386, %v385, 0.0
        %388 = vadd.xlane.f32.xlu0 %v387
        %v389 = vpop.xlane.xlu0 %388
        %v390 = vrcp.pop 32.0
        %v391 = vmul.f32 %v389, %v390
        %v392 = vsub.f32 %v385, %v391
        %v393 = vmul.f32 %v392, %v392
        %v394 = vsel %vm386, %v393, 0.0
        %395 = vadd.xlane.f32.xlu0 %v394
        %v396 = vpop.xlane.xlu0 %395
        %v397 = vrcp.pop 31.0
        %v398 = vmul.f32 %v396, %v397
        %v399 = vrsqrt.pop %v398
        %v400 = vmul.f32 %v398, %v399
        %vm401 = vcmp.eq.f32.partialorder %v398, inf
        %v402 = vsel %vm401, %v398, %v400
        %vm403 = vcmp.eq.f32.partialorder %v398, 0.0
        %v404 = vand.u32 %v398, 2147483648
        %v405 = vsel %vm403, %v404, %v402
        %v406 = vadd.f32 %v405, 1e-06
        %v407 = vrcp.pop %v406
        %v408 = vmul.f32 1.0, %v407
        %v409 = vld [vmem:[#allocation5] sm:$0x1]
        %v410 = vmul.f32 %v392, %v408
        %v412 = vlaneseq
        %v413 = vshrl.u32 %v412, 7
        %v414 = vsub.s32 0, %v413
        %v415 = vrot.slane %v409, %v414
        %v417 = vmul.f32 %v415, %v410
        %v418 = vld [vmem:[#allocation7] sm:$0x1]
        %v420 = vlaneseq
        %v421 = vshrl.u32 %v420, 7
        %v422 = vsub.s32 0, %v421
        %v423 = vrot.slane %v418, %v422
        %v425 = vadd.f32 %v417, %v423
        %v426 = vld [vmem:[#allocation8] sm:$0xff]
        %v427 = vld [vmem:[#allocation8 + $0x8] sm:$0xff]
        %v428 = vld [vmem:[#allocation8 + $0x10] sm:$0xff]
        %v429 = vld [vmem:[#allocation8 + $0x18] sm:$0xff]
        %v430 = vld [vmem:[#allocation10] sm:$0x1]
        %v432 = vlaneseq
        %v433 = vshrl.u32 %v432, 7
        %v434 = vsub.s32 0, %v433
        %v435 = vrot.slane %v430, %v434
        %v438 = vsel %vm386, %v425, 0
        %440 = vmatprep.subr.mxu0 0.0
        %441 = vmatpush1.msra.mxu0 %v426
        %442 = vmatprep.subr.mxu0 0.0
        %443 = vmatpush1.msra.mxu0 %v427
        %444 = vmatprep.subr.mxu0 0.0
        %445 = vmatpush1.msra.mxu0 %v428
        %446 = vmatprep.subr.mxu0 0.0
        %447 = vmatpush1.msra.mxu0 %v429
        %448 = vmatprep.subr.mxu0 0.0
        %449 = vmatpush1.msra.mxu0 0.0
        %450 = vmatprep.subr.mxu0 0.0
        %451 = vmatpush1.msra.mxu0 0.0
        %452 = vmatprep.subr.mxu0 0.0
        %453 = vmatpush1.msra.mxu0 0.0
        %454 = vmatprep.subr.mxu0 0.0
        %455 = vmatpush1.msra.mxu0 0.0
        %456 = vmatprep.subr.mxu0 0.0
        %457 = vmatpush1.msra.mxu0 0.0
        %458 = vmatprep.subr.mxu0 0.0
        %459 = vmatpush1.msra.mxu0 0.0
        %460 = vmatprep.subr.mxu0 0.0
        %461 = vmatpush1.msra.mxu0 0.0
        %462 = vmatprep.subr.mxu0 0.0
        %463 = vmatpush1.msra.mxu0 0.0
        %464 = vmatprep.subr.mxu0 0.0
        %465 = vmatpush1.msra.mxu0 0.0
        %466 = vmatprep.subr.mxu0 0.0
        %467 = vmatpush1.msra.mxu0 0.0
        %468 = vmatprep.subr.mxu0 0.0
        %469 = vmatpush1.msra.mxu0 0.0
        %470 = vmatprep.subr.mxu0 0.0
        %471 = vmatpush1.msra.mxu0 0.0
        %472 = vmatprep.subr.mxu0 0.0
        %473 = vmatpush1.msra.mxu0 0.0
        %474 = vmatprep.subr.mxu0 0.0
        %475 = vmatpush1.msra.mxu0 0.0
        %476 = vmatprep.subr.mxu0 0.0
        %477 = vmatpush1.msra.mxu0 0.0
        %478 = vmatprep.subr.mxu0 0.0
        %479 = vmatpush1.msra.mxu0 0.0
        %480 = vmatprep.subr.mxu0 0.0
        %481 = vmatpush1.msra.mxu0 0.0
        %482 = vmatprep.subr.mxu0 0.0
        %483 = vmatpush1.msra.mxu0 0.0
        %484 = vmatprep.subr.mxu0 0.0
        %485 = vmatpush1.msra.mxu0 0.0
        %486 = vmatprep.subr.mxu0 0.0
        %487 = vmatpush1.msra.mxu0 0.0
        %488 = vmatprep.subr.mxu0 0.0
        %489 = vmatpush1.msra.mxu0 0.0
        %490 = vmatprep.subr.mxu0 0.0
        %491 = vmatpush1.msra.mxu0 0.0
        %492 = vmatprep.subr.mxu0 0.0
        %493 = vmatpush1.msra.mxu0 0.0
        %494 = vmatprep.subr.mxu0 0.0
        %495 = vmatpush1.msra.mxu0 0.0
        %496 = vmatprep.subr.mxu0 0.0
        %497 = vmatpush1.msra.mxu0 0.0
        %498 = vmatprep.subr.mxu0 0.0
        %499 = vmatpush1.msra.mxu0 0.0
        %500 = vmatprep.subr.mxu0 0.0
        %501 = vmatpush1.msra.mxu0 0.0
        %502 = vmatprep.subr.mxu0 0.0
        %503 = vmatpush1.msra.mxu0 0.0
        %504 = vmatprep.mubr.f32.mxu0 0.0
        %505 = vmatmul.mubr.f32.gmra.mrb[0].mxu0 %v438
        %v506 = vpop.f32.mrb[0].mxu0
        %v507 = vadd.f32 %v435, %v506
        %v508 = vpop.f32.mrb[0].mxu0
        %509 = vdwg.mxu0
        %vm510 = vcmask 64512
        %511 = vst.msk [vmem:[%s370] sm:$0xff] %vm510, %v507
        %513 = vrot.lane.b32.xlu0 %v507, 96
        %v514 = vpop.permute.xlu0 %513
        %516 = vst.msk [vmem:[%s377] sm:$0xff] %vm510, %v514
        %517 = vrot.lane.b32.xlu0 %v507, 64
        %v518 = vpop.permute.xlu0 %517
        %520 = vst.msk [vmem:[%s384] sm:$0xff] %vm510, %v518
        %521 = vrot.lane.b32.xlu0 %v507, 120
        %v522 = vpop.permute.xlu0 %521
        %s524 = scalar_lea.vmem %s370, 8 [#allocation11]
        %525 = vst.msk [vmem:[%s524] sm:$0xff] %vm510, %v522
        %526 = vrot.lane.b32.xlu0 %v507, 88
        %v527 = vpop.permute.xlu0 %526
        %s529 = scalar_lea.vmem %s377, 8 [#allocation12]
        %530 = vst.msk [vmem:[%s529] sm:$0xff] %vm510, %v527
        %531 = vrot.lane.b32.xlu0 %v507, 56
        %v532 = vpop.permute.xlu0 %531
        %s534 = scalar_lea.vmem %s384, 8 [#allocation14]
        %535 = vst.msk [vmem:[%s534] sm:$0xff] %vm510, %v532
        %536 = vrot.lane.b32.xlu0 %v507, 112
        %v537 = vpop.permute.xlu0 %536
        %s539 = scalar_lea.vmem %s370, 16 [#allocation11]
        %540 = vst.msk [vmem:[%s539] sm:$0xff] %vm510, %v537
        %541 = vrot.lane.b32.xlu0 %v507, 80
        %v542 = vpop.permute.xlu0 %541
        %s544 = scalar_lea.vmem %s377, 16 [#allocation12]
        %545 = vst.msk [vmem:[%s544] sm:$0xff] %vm510, %v542
        %546 = vrot.lane.b32.xlu0 %v507, 48
        %v547 = vpop.permute.xlu0 %546
        %s549 = scalar_lea.vmem %s384, 16 [#allocation14]
        %550 = vst.msk [vmem:[%s549] sm:$0xff] %vm510, %v547
        %551 = vrot.lane.b32.xlu0 %v507, 104
        %v552 = vpop.permute.xlu0 %551
        %s554 = scalar_lea.vmem %s370, 24 [#allocation11]
        %555 = vst.msk [vmem:[%s554] sm:$0xff] %vm510, %v552
        %556 = vrot.lane.b32.xlu0 %v507, 72
        %v557 = vpop.permute.xlu0 %556
        %s559 = scalar_lea.vmem %s377, 24 [#allocation12]
        %560 = vst.msk [vmem:[%s559] sm:$0xff] %vm510, %v557
        %561 = vrot.lane.b32.xlu0 %v507, 40
        %v562 = vpop.permute.xlu0 %561
        %s564 = scalar_lea.vmem %s384, 24 [#allocation14]
        %565 = vst.msk [vmem:[%s564] sm:$0xff] %vm510, %v562
        %s566 = sand.u32 %s164, 1
        %s567 = scalar_lea.sflag [#allocation4], %s566
        %s568 = sand.u32 %s164, 1
        %s569 = smul.addr %s568, 32
        %s570 = scalar_lea.vmem [#allocation11], %s569
        %s571 = sand.u32 %s30, 1
        %s572 = scalar_lea.sflag [#allocation13], %s571
        %s573 = sand.u32 %s192, 1
        %s574 = smul.addr %s573, 32
        %s575 = scalar_lea.vmem [#allocation12], %s574
        %s576 = sand.u32 %s30, 1
        %s577 = scalar_lea.sflag [#allocation13], %s576
        %s578 = sand.u32 %s220, 1
        %s579 = smul.addr %s578, 32
        %s580 = scalar_lea.vmem [#allocation14], %s579
        // Predicated region
        $region61: #{tpu_custom_call.1} parent=39 // pred_check
          %p581 = pneg %p174
        $region62: #{tpu_custom_call.1} parent=39 // pred_check_branch
          %583 = sbr.rel (%p581) target = $region64
        $region63: #{tpu_custom_call.1} parent=39 // pred_region
          %s585 = ssub.s32 512, 512
          %586 = vsyncadd %s567, %s585
          %s587 = smul.addr %s34, 4
          %s588 = sadd.s32 %s35, %s587
          %s589 = smul.addr %s588, 128
          %s590 = scalar_lea.hbm %s5, %s589
          %s591 = sshll.u32 %s570, 4
          %s592 = int_to_ptr.vmem [resolvable:$true] %s591
          %597 = dma.vmem_to_hbm [thread:$0]  %s592, 512, %s590, %s567, 128, 128, 8
        $region64: #{tpu_custom_call.1} parent=39 // pred_fallthru
          _
        // Predicated region
        $region65: #{tpu_custom_call.1} parent=39 // pred_check
          %p598 = pneg %p202
        $region66: #{tpu_custom_call.1} parent=39 // pred_check_branch
          %600 = sbr.rel (%p598) target = $region68
        $region67: #{tpu_custom_call.1} parent=39 // pred_region
          %s602 = ssub.s32 512, 512
          %603 = vsyncadd %s572, %s602
          %s604 = smul.addr %s34, 4
          %s605 = sadd.s32 %s35, %s604
          %s606 = smul.addr %s605, 128
          %s607 = scalar_lea.hbm %s6, %s606
          %s608 = sshll.u32 %s575, 4
          %s609 = int_to_ptr.vmem [resolvable:$true] %s608
          %614 = dma.vmem_to_hbm [thread:$0]  %s609, 512, %s607, %s572, 128, 128, 8
        $region68: #{tpu_custom_call.1} parent=39 // pred_fallthru
          _
        // Predicated region
        $region69: #{tpu_custom_call.1} parent=39 // pred_check
          %p615 = pneg %p230
        $region70: #{tpu_custom_call.1} parent=39 // pred_check_branch
          %617 = sbr.rel (%p615) target = $region72
        $region71: #{tpu_custom_call.1} parent=39 // pred_region
          %s619 = ssub.s32 512, 512
          %620 = vsyncadd %s577, %s619
          %s621 = smul.addr %s34, 4
          %s622 = sadd.s32 %s35, %s621
          %s623 = smul.addr %s622, 128
          %s624 = scalar_lea.hbm %s7, %s623
          %s625 = sshll.u32 %s580, 4
          %s626 = int_to_ptr.vmem [resolvable:$true] %s625
          %631 = dma.vmem_to_hbm [thread:$0]  %s626, 512, %s624, %s577, 128, 128, 8
        $region72: #{tpu_custom_call.1} parent=39 // pred_fallthru
          _
      $region40: #{tpu_custom_call.1} parent=5 // pred_fallthru
        _
      %p632 = scmp.le.s32.totalorder 2, %s25
      // Predicated region
      $region73: #{tpu_custom_call.1} parent=5 // pred_check
        %p633 = pneg %p632
      $region74: #{tpu_custom_call.1} parent=5 // pred_check_branch
        %635 = sbr.rel (%p633) target = $region76
      $region75: #{tpu_custom_call.1} parent=5 // pred_region
        %s636 = ssub.s32 %s25, 2
        // Predicated region
        $region77: #{tpu_custom_call.1} parent=75 // pred_check
          %p637 = pneg %p180
        $region78: #{tpu_custom_call.1} parent=75 // pred_check_branch
          %639 = sbr.rel (%p637) target = $region80
        $region79: #{tpu_custom_call.1} parent=75 // pred_region
          %s640 = sand.u32 %s165, 1
          %s641 = scalar_lea.sflag [#allocation4], %s640
          %s642 = sand.u32 %s165, 1
          %s643 = smul.addr %s642, 32
          %s644 = scalar_lea.vmem [#allocation11], %s643
          %645 = dma.done %s641, 512
        $region80: #{tpu_custom_call.1} parent=75 // pred_fallthru
          _
        // Predicated region
        $region81: #{tpu_custom_call.1} parent=75 // pred_check
          %p646 = pneg %p208
        $region82: #{tpu_custom_call.1} parent=75 // pred_check_branch
          %648 = sbr.rel (%p646) target = $region84
        $region83: #{tpu_custom_call.1} parent=75 // pred_region
          %s649 = sand.u32 %s31, 1
          %s650 = scalar_lea.sflag [#allocation13], %s649
          %s651 = sand.u32 %s193, 1
          %s652 = smul.addr %s651, 32
          %s653 = scalar_lea.vmem [#allocation12], %s652
          %654 = dma.done %s650, 512
        $region84: #{tpu_custom_call.1} parent=75 // pred_fallthru
          _
        // Predicated region
        $region85: #{tpu_custom_call.1} parent=75 // pred_check
          %p655 = pneg %p236
        $region86: #{tpu_custom_call.1} parent=75 // pred_check_branch
          %657 = sbr.rel (%p655) target = $region88
        $region87: #{tpu_custom_call.1} parent=75 // pred_region
          %s658 = sand.u32 %s31, 1
          %s659 = scalar_lea.sflag [#allocation13], %s658
          %s660 = sand.u32 %s221, 1
          %s661 = smul.addr %s660, 32
          %s662 = scalar_lea.vmem [#allocation14], %s661
          %663 = dma.done %s659, 512
        $region88: #{tpu_custom_call.1} parent=75 // pred_fallthru
          _
      $region76: #{tpu_custom_call.1} parent=5 // pred_fallthru
        _
    $region6: #{tpu_custom_call.1} parent=1 // loop_footer
      %s29 = sadd.s32 1, %s25
    $region7: #{tpu_custom_call.1} parent=1 // loop_footer_branch
      %24 = sbr.rel target = $region3
    $region8: #{tpu_custom_call.1} parent=1 // loop_exit
      _
    %664 = vsyncpa [#allocation3], 1
    %s665 = scalar_lea.sflag [#allocation3], 1
    %666 = vsyncpa %s665, 1
    %667 = vsyncpa [#allocation6], 1
    %668 = vsyncpa [#allocation9], 1
    %669 = vsyncpa [#allocation4], 1
    %s670 = scalar_lea.sflag [#allocation4], 1
    %671 = vsyncpa %s670, 1
    %672 = vsyncpa [#allocation13], 1
    %s673 = scalar_lea.sflag [#allocation13], 1
    %674 = vsyncpa %s673, 1

</llo_original>
